<compile_context>
chip_gen: v5e
topology: v5e:2x2
jax: 0.10.0
libtpu: 0.0.40
codegen_flags: <defaults>
</compile_context>

<pallas_src>
import functools

import jax
import jax.numpy as jnp
from jax.experimental import pallas as pl
from jax.experimental.pallas import tpu as pltpu


def _joint_loss_kernel(vp_ref, vt_ref, pp_ref, pt_ref, seis_ref, out_ref, acc_ref,
                       *, dt: float, dx: float):
    s = pl.program_id(1)
    t = pl.program_id(2)
    last_s = pl.num_programs(1) - 1
    last_t = pl.num_programs(2) - 1

    # ---- per-batch init: zero the vector accumulator (runs at the first step of every
    #      batch, so the B axis can safely be sharded across TensorCores) --------------
    @pl.when((s == 0) & (t == 0))
    def _init():
        acc_ref[...] = jnp.zeros_like(acc_ref)

    # ---- dominant stream: elementwise |diff| accumulate (pure VPU, no per-step
    #      reduction, no SMEM scalar RMW) ----------------------------------------------
    pp = pp_ref[0, 0].astype(jnp.float32)       # [TR, L] lane-dense tile
    pt = pt_ref[0, 0].astype(jnp.float32)
    acc_ref[...] += jnp.abs(pp - pt)

    # ---- per-batch finalize: one reduce for l_fwd + the small l_inv / l_pde terms on
    #      the resident [T, X] slabs; write this batch's partial sums ------------------
    @pl.when((s == last_s) & (t == last_t))
    def _finalize():
        fwd_sum = jnp.sum(acc_ref[...])

        vp = vp_ref[0].astype(jnp.float32)      # [T, X]
        vt = vt_ref[0].astype(jnp.float32)
        inv_sum = jnp.sum(jnp.abs(vp - vt))

        p = seis_ref[0, 0].astype(jnp.float32)  # [T, X]  (source 0 only)
        inv_dt2 = jnp.float32(1.0 / (dt * dt))
        inv_dx2 = jnp.float32(1.0 / (dx * dx))
        # second time derivative (sublane shifts, full lane width): [T-2, X]
        d2t = (p[2:, :] - 2.0 * p[1:-1, :] + p[:-2, :]) * inv_dt2
        # 1-D spatial Laplacian along receivers: [T, X-2]
        lap = (p[:, 2:] - 2.0 * p[:, 1:-1] + p[:, :-2]) * inv_dx2
        v2 = vp[1:-1, 1:-1] ** 2                # [T-2, X-2]
        res = d2t[:, 1:-1] - v2 * lap[1:-1, :]
        pde_sum = jnp.sum(jnp.abs(res))

        lane = jax.lax.broadcasted_iota(jnp.int32, (1, 1, 128), 2)
        out_ref[...] = jnp.where(
            lane == 0, inv_sum,
            jnp.where(lane == 1, fwd_sum,
                      jnp.where(lane == 2, pde_sum, jnp.float32(0.0))))


def _pick_row_tile(R: int, target_rows: int = 2048) -> int:
    """Largest row-tile <= target_rows that divides R and is sublane-aligned (mult. of 8),
    or R itself (full-dim blocks are always legal) when R is small / has no such divisor.
    target_rows=2048 with 128 f32 lanes -> ~1 MiB per streamed buffer."""
    if R <= target_rows:
        return R
    for tr in range(target_rows, 7, -1):
        if R % tr == 0 and tr % 8 == 0:
            return tr
    # TODO(synk): pad R up to an 8-aligned tile and mask, instead of a single full-R block
    # (only matters for pathological T*X with no 8-aligned divisor).
    return R


def joint_loss_pallas(v_pred, v_true, p_pred, p_true, seis_batch,
                      lam_inv=1.0, lam_fwd=1.0, lam_pde=0.1,
                      dt=0.001, dx=10.0):
    B, S, T, X = p_pred.shape
    assert v_pred.shape == (B, T, X) and v_true.shape == (B, T, X)
    assert p_true.shape == (B, S, T, X)
    assert seis_batch.shape[0] == B and seis_batch.shape[2:] == (T, X)

    # Lane-dense streaming layout for the dominant p traffic: a row-major (free) reshape
    # [B,S,T,X] -> [B,S,T*X/128,128] makes every vreg load / DMA row a full 128 lanes
    # even when X < 128.  Fall back to the natural [T, X] tiling otherwise.
    if (T * X) % 128 == 0:
        R, L = (T * X) // 128, 128
    else:
        R, L = T, X
    p_pred_r = p_pred.reshape(B, S, R, L)
    p_true_r = p_true.reshape(B, S, R, L)

    TR = _pick_row_tile(R)
    NT = R // TR

    # VMEM budget, re-derived for v7x's 64 MiB physical VMEM: residents (double-buffered)
    # + double-buffered p tiles + accumulator + stencil temporaries, clamped to 48 MiB.
    p_item = jnp.dtype(p_pred.dtype).itemsize
    v_item = jnp.dtype(v_pred.dtype).itemsize
    s_item = jnp.dtype(seis_batch.dtype).itemsize
    resident = 2 * 2 * T * X * v_item + 2 * T * X * s_item
    streamed = 2 * 2 * TR * L * p_item
    stencil = 6 * T * X * 4
    est = resident + streamed + stencil + TR * L * 4 + (2 << 20)
    vmem_limit = int(min(max(est, 16 << 20), 48 << 20))

    kernel = functools.partial(_joint_loss_kernel, dt=dt, dx=dx)
    partials = pl.pallas_call(
        kernel,
        out_shape=jax.ShapeDtypeStruct((B, 1, 128), jnp.float32),
        grid=(B, S, NT),
        in_specs=[
            # resident per batch (block index changes only with b)
            pl.BlockSpec((1, T, X), lambda b, s, t: (b, 0, 0)),          # v_pred
            pl.BlockSpec((1, T, X), lambda b, s, t: (b, 0, 0)),          # v_true
            # streamed, double-buffered, lane-dense tiles of the dominant traffic
            pl.BlockSpec((1, 1, TR, L), lambda b, s, t: (b, s, t, 0)),   # p_pred
            pl.BlockSpec((1, 1, TR, L), lambda b, s, t: (b, s, t, 0)),   # p_true
            # only source 0 of the seismograms is ever DMA'd HBM->VMEM
            pl.BlockSpec((1, 1, T, X), lambda b, s, t: (b, 0, 0, 0)),    # seis_batch
        ],
        # per-batch partial sums -> B axis can run on both TensorCores
        out_specs=pl.BlockSpec((1, 1, 128), lambda b, s, t: (b, 0, 0)),
        scratch_shapes=[pltpu.VMEM((TR, L), jnp.float32)],
        compiler_params=pltpu.CompilerParams(
            dimension_semantics=("parallel", "arbitrary", "arbitrary"),
            vmem_limit_bytes=vmem_limit,
        ),
    )(v_pred, v_true, p_pred_r, p_true_r, seis_batch)

    inv_sum = jnp.sum(partials[:, 0, 0])
    fwd_sum = jnp.sum(partials[:, 0, 1])
    pde_sum = jnp.sum(partials[:, 0, 2])
    l_inv = inv_sum / jnp.float32(v_pred.size)
    l_fwd = fwd_sum / jnp.float32(p_pred.size)
    l_pde = pde_sum / jnp.float32(B * (T - 2) * (X - 2))
    total = lam_inv * l_inv + lam_fwd * l_fwd + lam_pde * l_pde
    return total, {"l_inv": l_inv, "l_fwd": l_fwd, "l_pde": l_pde}


def joint_loss_ref(v_pred, v_true, p_pred, p_true, seis_batch,
                   lam_inv=1.0, lam_fwd=1.0, lam_pde=0.1,
                   dt=0.001, dx=10.0):
    """Pure-JAX reference mirroring the PyTorch semantics."""
    l_inv = jnp.mean(jnp.abs(v_pred - v_true))
    l_fwd = jnp.mean(jnp.abs(p_pred - p_true))
    p = seis_batch[:, 0]
    d2t = (p[:, 2:] - 2 * p[:, 1:-1] + p[:, :-2]) / (dt * dt)
    lap = (p[:, :, 2:] - 2 * p[:, :, 1:-1] + p[:, :, :-2]) / (dx * dx)
    v2 = v_pred[..., 1:-1, 1:-1] ** 2
    res = d2t[..., 1:-1] - v2 * lap[:, 1:-1]
    l_pde = jnp.mean(jnp.abs(res))
    total = lam_inv * l_inv + lam_fwd * l_fwd + lam_pde * l_pde
    return total, {"l_inv": l_inv, "l_fwd": l_fwd, "l_pde": l_pde}


if __name__ == "__main__":
    B, S, T, X = 2, 3, 16, 16
    key = jax.random.PRNGKey(0)
    k1, k2, k3, k4, k5 = jax.random.split(key, 5)

    # velocity models [B, T, X] (positive)
    v_pred = 1.5 + jnp.abs(jax.random.normal(k1, (B, T, X), jnp.float32))
    v_true = 1.5 + jnp.abs(jax.random.normal(k2, (B, T, X), jnp.float32))
    # predicted / true wavefields and observed seismograms [B, S, T, X]
    p_pred = jax.random.normal(k3, (B, S, T, X), jnp.float32)
    p_true = jax.random.normal(k4, (B, S, T, X), jnp.float32)
    seis_batch = jax.random.normal(k5, (B, S, T, X), jnp.float32)

    total, parts = joint_loss_pallas(v_pred, v_true, p_pred, p_true, seis_batch)
    total = jax.block_until_ready(total)

    total_ref, parts_ref = joint_loss_ref(v_pred, v_true, p_pred, p_true, seis_batch)
    assert jnp.allclose(total, total_ref, rtol=1e-3, atol=1e-3), (total, total_ref)
    for name in ("l_inv", "l_fwd", "l_pde"):
        assert jnp.allclose(parts[name], parts_ref[name], rtol=1e-3, atol=1e-3), name

    print("KERNEL_OK")
</pallas_src>

<mosaic_0001>
module attributes {stable_mosaic.version = 11 : i64} {
  func.func @_joint_loss_kernel(%arg0: i32, %arg1: i32, %arg2: i32, %arg3: memref<1x16x16xf32, #tpu.memory_space<vmem>>, %arg4: memref<1x16x16xf32, #tpu.memory_space<vmem>>, %arg5: memref<1x1x2x128xf32, #tpu.memory_space<vmem>>, %arg6: memref<1x1x2x128xf32, #tpu.memory_space<vmem>>, %arg7: memref<1x1x16x16xf32, #tpu.memory_space<vmem>>, %arg8: memref<1x1x128xf32, #tpu.memory_space<vmem>>, %arg9: memref<2x128xf32, #tpu.memory_space<vmem>>) attributes {dimension_semantics = [#tpu.dimension_semantics<parallel>, #tpu.dimension_semantics<arbitrary>, #tpu.dimension_semantics<arbitrary>], iteration_bounds = array<i64: 2, 3, 1>, scalar_prefetch = 0 : i64, scratch_operands = 1 : i64, tpu.core_type = #tpu.core_type<tc>, window_params = [{transform_indices = @transform_0, window_bounds = array<i64: 1, 16, 16>}, {transform_indices = @transform_1, window_bounds = array<i64: 1, 16, 16>}, {transform_indices = @transform_2, window_bounds = array<i64: 1, 1, 2, 128>}, {transform_indices = @transform_3, window_bounds = array<i64: 1, 1, 2, 128>}, {transform_indices = @transform_4, window_bounds = array<i64: 1, 1, 16, 16>}, {transform_indices = @transform_5, window_bounds = array<i64: 1, 1, 128>}]} {
    %c0_i32 = arith.constant 0 : i32
    %0 = arith.cmpi eq, %arg1, %c0_i32 : i32
    %c0_i32_0 = arith.constant 0 : i32
    %1 = arith.cmpi eq, %arg2, %c0_i32_0 : i32
    %2 = arith.andi %0, %1 : i1
    %3 = arith.extui %2 : i1 to i32
    %c0_i32_1 = arith.constant 0 : i32
    %4 = arith.cmpi ne, %3, %c0_i32_1 : i32
    scf.if %4 {
      %cst = arith.constant 0.000000e+00 : f32
      %19 = vector.broadcast %cst : f32 to vector<2x128xf32>
      %c0_15 = arith.constant 0 : index
      %c0_16 = arith.constant 0 : index
      %20 = vector.load %arg9[%c0_15, %c0_16] : memref<2x128xf32, #tpu.memory_space<vmem>>, vector<2x128xf32>
      tpu.vector_store %arg9[%c0_15, %c0_16], %19 {strides = array<i32>} : memref<2x128xf32, #tpu.memory_space<vmem>>, vector<2x128xf32>,
    } else {
    }
    %c0 = arith.constant 0 : index
    %c0_2 = arith.constant 0 : index
    %c0_3 = arith.constant 0 : index
    %c0_4 = arith.constant 0 : index
    %5 = vector.load %arg5[%c0, %c0_2, %c0_3, %c0_4] : memref<1x1x2x128xf32, #tpu.memory_space<vmem>>, vector<1x1x2x128xf32>
    %6 = vector.shape_cast %5 : vector<1x1x2x128xf32> to vector<2x128xf32>
    %c0_5 = arith.constant 0 : index
    %c0_6 = arith.constant 0 : index
    %c0_7 = arith.constant 0 : index
    %c0_8 = arith.constant 0 : index
    %7 = vector.load %arg6[%c0_5, %c0_6, %c0_7, %c0_8] : memref<1x1x2x128xf32, #tpu.memory_space<vmem>>, vector<1x1x2x128xf32>
    %8 = vector.shape_cast %7 : vector<1x1x2x128xf32> to vector<2x128xf32>
    %c0_9 = arith.constant 0 : index
    %c0_10 = arith.constant 0 : index
    %9 = vector.load %arg9[%c0_9, %c0_10] : memref<2x128xf32, #tpu.memory_space<vmem>>, vector<2x128xf32>
    %10 = arith.subf %6, %8 : vector<2x128xf32>
    %11 = math.absf %10 : vector<2x128xf32>
    %12 = arith.addf %9, %11 : vector<2x128xf32>
    %c0_11 = arith.constant 0 : index
    %c0_12 = arith.constant 0 : index
    %13 = vector.load %arg9[%c0_11, %c0_12] : memref<2x128xf32, #tpu.memory_space<vmem>>, vector<2x128xf32>
    tpu.vector_store %arg9[%c0_11, %c0_12], %12 {strides = array<i32>} : memref<2x128xf32, #tpu.memory_space<vmem>>, vector<2x128xf32>,
    %c2_i32 = arith.constant 2 : i32
    %14 = arith.cmpi eq, %arg1, %c2_i32 : i32
    %c0_i32_13 = arith.constant 0 : i32
    %15 = arith.cmpi eq, %arg2, %c0_i32_13 : i32
    %16 = arith.andi %14, %15 : i1
    %17 = arith.extui %16 : i1 to i32
    %c0_i32_14 = arith.constant 0 : i32
    %18 = arith.cmpi ne, %17, %c0_i32_14 : i32
    scf.if %18 {
      %c0_15 = arith.constant 0 : index
      %c0_16 = arith.constant 0 : index
      %19 = vector.load %arg9[%c0_15, %c0_16] : memref<2x128xf32, #tpu.memory_space<vmem>>, vector<2x128xf32>
      %20 = vector.shape_cast %19 : vector<2x128xf32> to vector<1x2x128xf32>
      %cst = arith.constant dense<0.000000e+00> : vector<1xf32>
      %21 = vector.multi_reduction <add>, %20, %cst [1, 2] : vector<1x2x128xf32> to vector<1xf32>
      %22 = vector.shape_cast %21 : vector<1xf32> to vector<1x1x1xf32>
      %23 = vector.extract %22[0, 0, 0] : f32 from vector<1x1x1xf32>
      %c0_17 = arith.constant 0 : index
      %c0_18 = arith.constant 0 : index
      %c0_19 = arith.constant 0 : index
      %24 = vector.load %arg3[%c0_17, %c0_18, %c0_19] : memref<1x16x16xf32, #tpu.memory_space<vmem>>, vector<1x16x16xf32>
      %25 = vector.shape_cast %24 : vector<1x16x16xf32> to vector<16x16xf32>
      %c0_20 = arith.constant 0 : index
      %c0_21 = arith.constant 0 : index
      %c0_22 = arith.constant 0 : index
      %26 = vector.load %arg4[%c0_20, %c0_21, %c0_22] : memref<1x16x16xf32, #tpu.memory_space<vmem>>, vector<1x16x16xf32>
      %27 = vector.shape_cast %26 : vector<1x16x16xf32> to vector<16x16xf32>
      %28 = arith.subf %25, %27 : vector<16x16xf32>
      %29 = math.absf %28 : vector<16x16xf32>
      %30 = vector.shape_cast %29 : vector<16x16xf32> to vector<1x16x16xf32>
      %cst_23 = arith.constant dense<0.000000e+00> : vector<1xf32>
      %31 = vector.multi_reduction <add>, %30, %cst_23 [1, 2] : vector<1x16x16xf32> to vector<1xf32>
      %32 = vector.shape_cast %31 : vector<1xf32> to vector<1x1x1xf32>
      %33 = vector.extract %32[0, 0, 0] : f32 from vector<1x1x1xf32>
      %c0_24 = arith.constant 0 : index
      %c0_25 = arith.constant 0 : index
      %c0_26 = arith.constant 0 : index
      %c0_27 = arith.constant 0 : index
      %34 = vector.load %arg7[%c0_24, %c0_25, %c0_26, %c0_27] : memref<1x1x16x16xf32, #tpu.memory_space<vmem>>, vector<1x1x16x16xf32>
      %35 = vector.shape_cast %34 : vector<1x1x16x16xf32> to vector<16x16xf32>
      %36 = vector.extract_strided_slice %35 {offsets = [2, 0], sizes = [14, 16], strides = [1, 1]} : vector<16x16xf32> to vector<14x16xf32>
      %37 = vector.extract_strided_slice %35 {offsets = [1, 0], sizes = [14, 16], strides = [1, 1]} : vector<16x16xf32> to vector<14x16xf32>
      %cst_28 = arith.constant 2.000000e+00 : f32
      %38 = vector.broadcast %cst_28 : f32 to vector<14x16xf32>
      %39 = arith.mulf %38, %37 : vector<14x16xf32>
      %40 = arith.subf %36, %39 : vector<14x16xf32>
      %41 = vector.extract_strided_slice %35 {offsets = [0, 0], sizes = [14, 16], strides = [1, 1]} : vector<16x16xf32> to vector<14x16xf32>
      %42 = arith.addf %40, %41 : vector<14x16xf32>
      %cst_29 = arith.constant 1.000000e+06 : f32
      %43 = vector.broadcast %cst_29 : f32 to vector<14x16xf32>
      %44 = arith.mulf %42, %43 : vector<14x16xf32>
      %45 = vector.extract_strided_slice %35 {offsets = [0, 2], sizes = [16, 14], strides = [1, 1]} : vector<16x16xf32> to vector<16x14xf32>
      %46 = vector.extract_strided_slice %35 {offsets = [0, 1], sizes = [16, 14], strides = [1, 1]} : vector<16x16xf32> to vector<16x14xf32>
      %cst_30 = arith.constant 2.000000e+00 : f32
      %47 = vector.broadcast %cst_30 : f32 to vector<16x14xf32>
      %48 = arith.mulf %47, %46 : vector<16x14xf32>
      %49 = arith.subf %45, %48 : vector<16x14xf32>
      %50 = vector.extract_strided_slice %35 {offsets = [0, 0], sizes = [16, 14], strides = [1, 1]} : vector<16x16xf32> to vector<16x14xf32>
      %51 = arith.addf %49, %50 : vector<16x14xf32>
      %cst_31 = arith.constant 0.00999999977 : f32
      %52 = vector.broadcast %cst_31 : f32 to vector<16x14xf32>
      %53 = arith.mulf %51, %52 : vector<16x14xf32>
      %54 = vector.extract_strided_slice %25 {offsets = [1, 1], sizes = [14, 14], strides = [1, 1]} : vector<16x16xf32> to vector<14x14xf32>
      %55 = arith.mulf %54, %54 : vector<14x14xf32>
      %56 = vector.extract_strided_slice %44 {offsets = [0, 1], sizes = [14, 14], strides = [1, 1]} : vector<14x16xf32> to vector<14x14xf32>
      %57 = vector.extract_strided_slice %53 {offsets = [1, 0], sizes = [14, 14], strides = [1, 1]} : vector<16x14xf32> to vector<14x14xf32>
      %58 = arith.mulf %55, %57 : vector<14x14xf32>
      %59 = arith.subf %56, %58 : vector<14x14xf32>
      %60 = math.absf %59 : vector<14x14xf32>
      %61 = vector.shape_cast %60 : vector<14x14xf32> to vector<1x14x14xf32>
      %cst_32 = arith.constant dense<0.000000e+00> : vector<1xf32>
      %62 = vector.multi_reduction <add>, %61, %cst_32 [1, 2] : vector<1x14x14xf32> to vector<1xf32>
      %63 = vector.shape_cast %62 : vector<1xf32> to vector<1x1x1xf32>
      %64 = vector.extract %63[0, 0, 0] : f32 from vector<1x1x1xf32>
      %65 = tpu.iota {dimensions = array<i32: 2>} : vector<1x1x128xi32>
      %c0_i32_33 = arith.constant 0 : i32
      %66 = vector.broadcast %c0_i32_33 : i32 to vector<1x1x128xi32>
      %67 = arith.cmpi eq, %65, %66 : vector<1x1x128xi32>
      %c1_i32 = arith.constant 1 : i32
      %68 = vector.broadcast %c1_i32 : i32 to vector<1x1x128xi32>
      %69 = arith.cmpi eq, %65, %68 : vector<1x1x128xi32>
      %c2_i32_34 = arith.constant 2 : i32
      %70 = vector.broadcast %c2_i32_34 : i32 to vector<1x1x128xi32>
      %71 = arith.cmpi eq, %65, %70 : vector<1x1x128xi32>
      %cst_35 = arith.constant 0.000000e+00 : f32
      %72 = vector.broadcast %64 : f32 to vector<1x1x128xf32>
      %73 = vector.broadcast %cst_35 : f32 to vector<1x1x128xf32>
      %74 = arith.select %71, %72, %73 : vector<1x1x128xi1>, vector<1x1x128xf32>
      %75 = vector.broadcast %23 : f32 to vector<1x1x128xf32>
      %76 = arith.select %69, %75, %74 : vector<1x1x128xi1>, vector<1x1x128xf32>
      %77 = vector.broadcast %33 : f32 to vector<1x1x128xf32>
      %78 = arith.select %67, %77, %76 : vector<1x1x128xi1>, vector<1x1x128xf32>
      %c0_36 = arith.constant 0 : index
      %c0_37 = arith.constant 0 : index
      %c0_38 = arith.constant 0 : index
      %79 = vector.load %arg8[%c0_36, %c0_37, %c0_38] : memref<1x1x128xf32, #tpu.memory_space<vmem>>, vector<1x1x128xf32>
      tpu.vector_store %arg8[%c0_36, %c0_37, %c0_38], %78 {strides = array<i32>} : memref<1x1x128xf32, #tpu.memory_space<vmem>>, vector<1x1x128xf32>,
    } else {
    }
    return
  }
  func.func @transform_0(%arg0: i32, %arg1: i32, %arg2: i32) -> (i32, i32, i32) {
    %c0_i32 = arith.constant 0 : i32
    %c0_i32_0 = arith.constant 0 : i32
    %c0_i32_1 = arith.constant 0 : i32
    return %arg0, %c0_i32, %c0_i32_0 : i32, i32, i32
  }
  func.func @transform_1(%arg0: i32, %arg1: i32, %arg2: i32) -> (i32, i32, i32) {
    %c0_i32 = arith.constant 0 : i32
    %c0_i32_0 = arith.constant 0 : i32
    %c0_i32_1 = arith.constant 0 : i32
    return %arg0, %c0_i32, %c0_i32_0 : i32, i32, i32
  }
  func.func @transform_2(%arg0: i32, %arg1: i32, %arg2: i32) -> (i32, i32, i32, i32) {
    %c0_i32 = arith.constant 0 : i32
    %c0_i32_0 = arith.constant 0 : i32
    return %arg0, %arg1, %arg2, %c0_i32 : i32, i32, i32, i32
  }
  func.func @transform_3(%arg0: i32, %arg1: i32, %arg2: i32) -> (i32, i32, i32, i32) {
    %c0_i32 = arith.constant 0 : i32
    %c0_i32_0 = arith.constant 0 : i32
    return %arg0, %arg1, %arg2, %c0_i32 : i32, i32, i32, i32
  }
  func.func @transform_4(%arg0: i32, %arg1: i32, %arg2: i32) -> (i32, i32, i32, i32) {
    %c0_i32 = arith.constant 0 : i32
    %c0_i32_0 = arith.constant 0 : i32
    %c0_i32_1 = arith.constant 0 : i32
    %c0_i32_2 = arith.constant 0 : i32
    return %arg0, %c0_i32, %c0_i32_0, %c0_i32_1 : i32, i32, i32, i32
  }
  func.func @transform_5(%arg0: i32, %arg1: i32, %arg2: i32) -> (i32, i32, i32) {
    %c0_i32 = arith.constant 0 : i32
    %c0_i32_0 = arith.constant 0 : i32
    %c0_i32_1 = arith.constant 0 : i32
    return %arg0, %c0_i32, %c0_i32_0 : i32, i32, i32
  }
}

</mosaic_0001>

<llo_original>
// kernel: tpu_custom_call.1
$region0: #{tpu_custom_call.1}
  #allocation0 [shape = 'u32[]', space=smem, size = 0x4, offset = 0x4, fixed_abs, tag = 'smem constant byte address 0x4 - core index']
  #allocation1 [shape = 'u32[72,128]{1,0:T(1,128)}', space=vmem, size = 0x9000, scoped, tag = 'internal scratch']
  #allocation2 [shape = 'f32[2,128]{1,0:T(2,128)}', space=vmem, size = 0x400, scoped, tag = 'scratch operand']
  %s0 = inlined_call_operand.hbm [shape: f32[2,16,16], index: 0, kind: input, shape index: {}]
  %s1 = inlined_call_operand.hbm [shape: f32[2,16,16], index: 1, kind: input, shape index: {}]
  %s2 = inlined_call_operand.hbm [shape: f32[2,3,2,128], index: 2, kind: input, shape index: {}]
  %s3 = inlined_call_operand.hbm [shape: f32[2,3,2,128], index: 3, kind: input, shape index: {}]
  %s4 = inlined_call_operand.hbm [shape: f32[2,3,16,16], index: 4, kind: input, shape index: {}]
  %s5 = inlined_call_operand.hbm [shape: f32[2,1,128], index: 5, kind: output, shape index: {}]
  %s6 = sld [smem:[#allocation0]]
  $region81: #{tpu_custom_call.1} parent=0
    _
  %s8 = ssub.s32 1, %s6
  %s9 = scalar_select 0, %s8, %s6
  $region1: #{tpu_custom_call.1} parent=0
    #allocation3 [shape = 'u8[16384]{0}', space=vmem, size = 0x4000, scoped, tag = 'input window, operand 0']
    #allocation4 [shape = 's32[2]{0}', space=sflag, size = 0x8, scoped, tag = 'scoped memory for tpu_custom_call.1']
    #allocation5 [shape = 's32[2]{0}', space=sflag, size = 0x8, scoped, tag = 'scoped memory for tpu_custom_call.1']
    #allocation6 [shape = 'u8[16384]{0}', space=vmem, size = 0x4000, scoped, tag = 'input window, operand 1']
    #allocation7 [shape = 's32[2]{0}', space=sflag, size = 0x8, scoped, tag = 'scoped memory for tpu_custom_call.1']
    #allocation8 [shape = 'u8[2048]{0}', space=vmem, size = 0x800, scoped, tag = 'input window, operand 2']
    #allocation9 [shape = 'u8[2048]{0}', space=vmem, size = 0x800, scoped, tag = 'input window, operand 3']
    #allocation10 [shape = 's32[2]{0}', space=sflag, size = 0x8, scoped, tag = 'scoped memory for tpu_custom_call.1']
    #allocation11 [shape = 'u8[16384]{0}', space=vmem, size = 0x4000, scoped, tag = 'input window, operand 4']
    #allocation12 [shape = 'u8[1024]{0}', space=vmem, size = 0x400, scoped, tag = 'output window, operand 0']
    %10 = vsyncpa [#allocation4], 0
    %s11 = scalar_lea.sflag [#allocation4], 1
    %12 = vsyncpa %s11, 0
    %13 = vsyncpa [#allocation7], 0
    %s14 = scalar_lea.sflag [#allocation7], 1
    %15 = vsyncpa %s14, 0
    %16 = vsyncpa [#allocation10], 0
    %s17 = scalar_lea.sflag [#allocation10], 1
    %18 = vsyncpa %s17, 0
    %19 = vsyncpa [#allocation5], 0
    %s20 = scalar_lea.sflag [#allocation5], 1
    %21 = vsyncpa %s20, 0
    loop: start=0, step=1, limit=8
    $region2: #{tpu_custom_call.1} parent=1 // loop_pre_header
      _
    $region3: #{tpu_custom_call.1} parent=1 // loop_header
      %s23 = sphi 0, %s27
      %p24 = scmp.ge.s32.totalorder %s23, 8
      %s30 = sphi 0, %s49
      %s31 = sphi 0, %s45
      %s32 = sphi 0, %s41
      %s33 = sphi 0, %s30
      %s34 = sphi 0, %s31
      %s35 = sphi 0, %s32
      %s36 = sphi 0, %s33
      %s37 = sphi 0, %s34
      %s38 = sphi 0, %s35
      %s52 = sphi 0, %s54
      %s55 = sphi 0, %s52
      %s56 = sphi 0, %s55
      %s72 = sphi 0, %s56
      %s78 = sphi 0, %s80
      %s81 = sphi 0, %s78
      %s82 = sphi 0, %s81
      %s98 = sphi 0, %s82
      %s108 = sphi 0, %s110
      %s111 = sphi 0, %s108
      %s112 = sphi 0, %s111
      %s128 = sphi 0, %s112
      %s138 = sphi 0, %s140
      %s141 = sphi 0, %s138
      %s142 = sphi 0, %s141
      %s158 = sphi 0, %s142
      %s164 = sphi 0, %s166
      %s167 = sphi 0, %s164
      %s168 = sphi 0, %s167
      %s184 = sphi 0, %s168
      %s190 = sphi 0, %s192
      %s193 = sphi 0, %s190
      %s194 = sphi 0, %s193
      %s210 = sphi 0, %s194
    $region4: #{tpu_custom_call.1} parent=1 // loop_header_branch
      %26 = sbr.rel (%p24) target = $region8
    $region5: #{tpu_custom_call.1} parent=1 // loop_body
      %s28 = ssub.s32 %s23, 1
      %s29 = ssub.s32 %s23, 2
      %s39 = sadd.s32 1, %s32
      %p40 = scmp.ge.s32.totalorder %s39, 1
      %s41 = scalar_select %p40, 0, %s39
      %s42 = sadd.s32 1, %s31
      %s43 = scalar_select %p40, %s42, %s31
      %p44 = scmp.ge.s32.totalorder %s43, 3
      %s45 = scalar_select %p44, 0, %s43
      %s46 = sadd.s32 1, %s30
      %s47 = scalar_select %p44, %s46, %s30
      %p48 = scmp.ge.s32.totalorder %s47, 2
      %s49 = scalar_select %p48, 0, %s47
      %s50 = ssub.s32 %s30, %s49
      %p51 = scmp.eq.s32.totalorder %s50, 0
      %s53 = sadd.s32 %s52, 1
      %s54 = scalar_select %p51, %s52, %s53
      %p57 = pneg %p51
      %p58 = scmp.eq.s32.totalorder %s23, 5
      %p59 = por %p57, %p58
      %p60 = scmp.ne.s32.totalorder %s52, %s55
      %p61 = scmp.eq.s32.totalorder %s23, 0
      %p62 = por %p60, %p61
      %p63 = scmp.ne.s32.totalorder %s52, %s55
      %p64 = scmp.eq.s32.totalorder %s28, 5
      %p65 = por %p63, %p64
      %p66 = scmp.ne.s32.totalorder %s55, %s56
      %p67 = scmp.eq.s32.totalorder %s28, 0
      %p68 = por %p66, %p67
      %p69 = scmp.ne.s32.totalorder %s55, %s56
      %p70 = scmp.eq.s32.totalorder %s29, 5
      %p71 = por %p69, %p70
      %p73 = scmp.ne.s32.totalorder %s56, %s72
      %p74 = scmp.eq.s32.totalorder %s29, 0
      %p75 = por %p73, %p74
      %s76 = ssub.s32 %s30, %s49
      %p77 = scmp.eq.s32.totalorder %s76, 0
      %s79 = sadd.s32 %s78, 1
      %s80 = scalar_select %p77, %s78, %s79
      %p83 = pneg %p77
      %p84 = scmp.eq.s32.totalorder %s23, 5
      %p85 = por %p83, %p84
      %p86 = scmp.ne.s32.totalorder %s78, %s81
      %p87 = scmp.eq.s32.totalorder %s23, 0
      %p88 = por %p86, %p87
      %p89 = scmp.ne.s32.totalorder %s78, %s81
      %p90 = scmp.eq.s32.totalorder %s28, 5
      %p91 = por %p89, %p90
      %p92 = scmp.ne.s32.totalorder %s81, %s82
      %p93 = scmp.eq.s32.totalorder %s28, 0
      %p94 = por %p92, %p93
      %p95 = scmp.ne.s32.totalorder %s81, %s82
      %p96 = scmp.eq.s32.totalorder %s29, 5
      %p97 = por %p95, %p96
      %p99 = scmp.ne.s32.totalorder %s82, %s98
      %p100 = scmp.eq.s32.totalorder %s29, 0
      %p101 = por %p99, %p100
      %s102 = ssub.s32 %s30, %s49
      %s103 = ssub.s32 %s31, %s45
      %s104 = sor.u32 %s102, %s103
      %s105 = ssub.s32 %s32, %s41
      %s106 = sor.u32 %s104, %s105
      %p107 = scmp.eq.s32.totalorder %s106, 0
      %s109 = sadd.s32 %s108, 1
      %s110 = scalar_select %p107, %s108, %s109
      %p113 = pneg %p107
      %p114 = scmp.eq.s32.totalorder %s23, 5
      %p115 = por %p113, %p114
      %p116 = scmp.ne.s32.totalorder %s108, %s111
      %p117 = scmp.eq.s32.totalorder %s23, 0
      %p118 = por %p116, %p117
      %p119 = scmp.ne.s32.totalorder %s108, %s111
      %p120 = scmp.eq.s32.totalorder %s28, 5
      %p121 = por %p119, %p120
      %p122 = scmp.ne.s32.totalorder %s111, %s112
      %p123 = scmp.eq.s32.totalorder %s28, 0
      %p124 = por %p122, %p123
      %p125 = scmp.ne.s32.totalorder %s111, %s112
      %p126 = scmp.eq.s32.totalorder %s29, 5
      %p127 = por %p125, %p126
      %p129 = scmp.ne.s32.totalorder %s112, %s128
      %p130 = scmp.eq.s32.totalorder %s29, 0
      %p131 = por %p129, %p130
      %s132 = ssub.s32 %s30, %s49
      %s133 = ssub.s32 %s31, %s45
      %s134 = sor.u32 %s132, %s133
      %s135 = ssub.s32 %s32, %s41
      %s136 = sor.u32 %s134, %s135
      %p137 = scmp.eq.s32.totalorder %s136, 0
      %s139 = sadd.s32 %s138, 1
      %s140 = scalar_select %p137, %s138, %s139
      %p143 = pneg %p137
      %p144 = scmp.eq.s32.totalorder %s23, 5
      %p145 = por %p143, %p144
      %p146 = scmp.ne.s32.totalorder %s138, %s141
      %p147 = scmp.eq.s32.totalorder %s23, 0
      %p148 = por %p146, %p147
      %p149 = scmp.ne.s32.totalorder %s138, %s141
      %p150 = scmp.eq.s32.totalorder %s28, 5
      %p151 = por %p149, %p150
      %p152 = scmp.ne.s32.totalorder %s141, %s142
      %p153 = scmp.eq.s32.totalorder %s28, 0
      %p154 = por %p152, %p153
      %p155 = scmp.ne.s32.totalorder %s141, %s142
      %p156 = scmp.eq.s32.totalorder %s29, 5
      %p157 = por %p155, %p156
      %p159 = scmp.ne.s32.totalorder %s142, %s158
      %p160 = scmp.eq.s32.totalorder %s29, 0
      %p161 = por %p159, %p160
      %s162 = ssub.s32 %s30, %s49
      %p163 = scmp.eq.s32.totalorder %s162, 0
      %s165 = sadd.s32 %s164, 1
      %s166 = scalar_select %p163, %s164, %s165
      %p169 = pneg %p163
      %p170 = scmp.eq.s32.totalorder %s23, 5
      %p171 = por %p169, %p170
      %p172 = scmp.ne.s32.totalorder %s164, %s167
      %p173 = scmp.eq.s32.totalorder %s23, 0
      %p174 = por %p172, %p173
      %p175 = scmp.ne.s32.totalorder %s164, %s167
      %p176 = scmp.eq.s32.totalorder %s28, 5
      %p177 = por %p175, %p176
      %p178 = scmp.ne.s32.totalorder %s167, %s168
      %p179 = scmp.eq.s32.totalorder %s28, 0
      %p180 = por %p178, %p179
      %p181 = scmp.ne.s32.totalorder %s167, %s168
      %p182 = scmp.eq.s32.totalorder %s29, 5
      %p183 = por %p181, %p182
      %p185 = scmp.ne.s32.totalorder %s168, %s184
      %p186 = scmp.eq.s32.totalorder %s29, 0
      %p187 = por %p185, %p186
      %s188 = ssub.s32 %s30, %s49
      %p189 = scmp.eq.s32.totalorder %s188, 0
      %s191 = sadd.s32 %s190, 1
      %s192 = scalar_select %p189, %s190, %s191
      %p195 = pneg %p189
      %p196 = scmp.eq.s32.totalorder %s23, 5
      %p197 = por %p195, %p196
      %p198 = scmp.ne.s32.totalorder %s190, %s193
      %p199 = scmp.eq.s32.totalorder %s23, 0
      %p200 = por %p198, %p199
      %p201 = scmp.ne.s32.totalorder %s190, %s193
      %p202 = scmp.eq.s32.totalorder %s28, 5
      %p203 = por %p201, %p202
      %p204 = scmp.ne.s32.totalorder %s193, %s194
      %p205 = scmp.eq.s32.totalorder %s28, 0
      %p206 = por %p204, %p205
      %p207 = scmp.ne.s32.totalorder %s193, %s194
      %p208 = scmp.eq.s32.totalorder %s29, 5
      %p209 = por %p207, %p208
      %p211 = scmp.ne.s32.totalorder %s194, %s210
      %p212 = scmp.eq.s32.totalorder %s29, 0
      %p213 = por %p211, %p212
      %p214 = scmp.le.s32.totalorder 1, %s23
      %p215 = scmp.lt.s32.totalorder %s23, 7
      %p216 = pnand %p214, %p215
      %p217 = pneg %p216
      // Predicated region
      $region9: #{tpu_custom_call.1} parent=5 // pred_check
        _
      $region10: #{tpu_custom_call.1} parent=5 // pred_check_branch
        %219 = sbr.rel (%p216) target = $region12
      $region11: #{tpu_custom_call.1} parent=5 // pred_region
        %s220 = ssub.s32 %s23, 1
      $region12: #{tpu_custom_call.1} parent=5 // pred_fallthru
        _
      %p221 = scmp.lt.s32.totalorder %s23, 6
      // Predicated region
      $region13: #{tpu_custom_call.1} parent=5 // pred_check
        %p222 = pneg %p221
      $region14: #{tpu_custom_call.1} parent=5 // pred_check_branch
        %224 = sbr.rel (%p222) target = $region16
      $region15: #{tpu_custom_call.1} parent=5 // pred_region
        // Predicated region
        $region17: #{tpu_custom_call.1} parent=15 // pred_check
          %p225 = pneg %p62
        $region18: #{tpu_custom_call.1} parent=15 // pred_check_branch
          %227 = sbr.rel (%p225) target = $region20
        $region19: #{tpu_custom_call.1} parent=15 // pred_region
          %s228 = sand.u32 %s52, 1
          %s229 = scalar_lea.sflag [#allocation4], %s228
          %s230 = sand.u32 %s52, 1
          %s231 = smul.addr %s230, 16
          %s232 = scalar_lea.vmem [#allocation3], %s231
          %234 = vsyncadd %s229, 0
          %s235 = smul.addr %s30, 2
          %s236 = smul.addr %s235, 8
          %s237 = scalar_lea.hbm %s0, %s236
          %s238 = sshll.u32 %s237, 4
          %s239 = int_to_ptr.hbm [resolvable:$true] %s238
          %s240 = sshll.u32 %s232, 4
          %s241 = int_to_ptr.vmem [resolvable:$true] %s240
          %246 = dma.hbm_to_vmem [thread:$0]  %s239, 256, %s241, %s229, 128, 128, 8
        $region20: #{tpu_custom_call.1} parent=15 // pred_fallthru
          _
        // Predicated region
        $region21: #{tpu_custom_call.1} parent=15 // pred_check
          %p247 = pneg %p88
        $region22: #{tpu_custom_call.1} parent=15 // pred_check_branch
          %249 = sbr.rel (%p247) target = $region24
        $region23: #{tpu_custom_call.1} parent=15 // pred_region
          %s250 = sand.u32 %s23, 1
          %s251 = scalar_lea.sflag [#allocation7], %s250
          %s252 = sand.u32 %s78, 1
          %s253 = smul.addr %s252, 16
          %s254 = scalar_lea.vmem [#allocation6], %s253
          %256 = vsyncadd %s251, 0
          %s257 = smul.addr %s30, 2
          %s258 = smul.addr %s257, 8
          %s259 = scalar_lea.hbm %s1, %s258
          %s260 = sshll.u32 %s259, 4
          %s261 = int_to_ptr.hbm [resolvable:$true] %s260
          %s262 = sshll.u32 %s254, 4
          %s263 = int_to_ptr.vmem [resolvable:$true] %s262
          %268 = dma.hbm_to_vmem [thread:$0]  %s261, 256, %s263, %s251, 128, 128, 8
        $region24: #{tpu_custom_call.1} parent=15 // pred_fallthru
          _
        // Predicated region
        $region25: #{tpu_custom_call.1} parent=15 // pred_check
          %p269 = pneg %p118
        $region26: #{tpu_custom_call.1} parent=15 // pred_check_branch
          %271 = sbr.rel (%p269) target = $region28
        $region27: #{tpu_custom_call.1} parent=15 // pred_region
          %s272 = sand.u32 %s23, 1
          %s273 = scalar_lea.sflag [#allocation7], %s272
          %s274 = sand.u32 %s108, 1
          %s275 = smul.addr %s274, 2
          %s276 = scalar_lea.vmem [#allocation8], %s275
          %278 = vsyncadd %s273, 0
          %s279 = sadd.s32 %s32, %s31
          %s280 = smul.addr %s30, 3
          %s281 = sadd.s32 %s279, %s280
          %s282 = smul.addr %s281, 2
          %s283 = scalar_lea.hbm %s2, %s282
          %s285 = sshll.u32 %s283, 4
          %s286 = int_to_ptr.hbm [resolvable:$true] %s285
          %s287 = sshll.u32 %s276, 4
          %s288 = int_to_ptr.vmem [resolvable:$true] %s287
          %290 = dma.hbm_to_vmem [thread:$0]  %s286, 32, %s288, %s273
        $region28: #{tpu_custom_call.1} parent=15 // pred_fallthru
          _
        // Predicated region
        $region29: #{tpu_custom_call.1} parent=15 // pred_check
          %p291 = pneg %p148
        $region30: #{tpu_custom_call.1} parent=15 // pred_check_branch
          %293 = sbr.rel (%p291) target = $region32
        $region31: #{tpu_custom_call.1} parent=15 // pred_region
          %s294 = sand.u32 %s23, 1
          %s295 = scalar_lea.sflag [#allocation10], %s294
          %s296 = sand.u32 %s138, 1
          %s297 = smul.addr %s296, 2
          %s298 = scalar_lea.vmem [#allocation9], %s297
          %300 = vsyncadd %s295, 0
          %s301 = sadd.s32 %s32, %s31
          %s302 = smul.addr %s30, 3
          %s303 = sadd.s32 %s301, %s302
          %s304 = smul.addr %s303, 2
          %s305 = scalar_lea.hbm %s3, %s304
          %s307 = sshll.u32 %s305, 4
          %s308 = int_to_ptr.hbm [resolvable:$true] %s307
          %s309 = sshll.u32 %s298, 4
          %s310 = int_to_ptr.vmem [resolvable:$true] %s309
          %312 = dma.hbm_to_vmem [thread:$0]  %s308, 32, %s310, %s295
        $region32: #{tpu_custom_call.1} parent=15 // pred_fallthru
          _
        // Predicated region
        $region33: #{tpu_custom_call.1} parent=15 // pred_check
          %p313 = pneg %p174
        $region34: #{tpu_custom_call.1} parent=15 // pred_check_branch
          %315 = sbr.rel (%p313) target = $region36
        $region35: #{tpu_custom_call.1} parent=15 // pred_region
          %s316 = sand.u32 %s23, 1
          %s317 = scalar_lea.sflag [#allocation10], %s316
          %s318 = sand.u32 %s164, 1
          %s319 = smul.addr %s318, 16
          %s320 = scalar_lea.vmem [#allocation11], %s319
          %322 = vsyncadd %s317, 0
          %s323 = smul.addr %s30, 6
          %s324 = smul.addr %s323, 8
          %s325 = scalar_lea.hbm %s4, %s324
          %s326 = sshll.u32 %s325, 4
          %s327 = int_to_ptr.hbm [resolvable:$true] %s326
          %s328 = sshll.u32 %s320, 4
          %s329 = int_to_ptr.vmem [resolvable:$true] %s328
          %334 = dma.hbm_to_vmem [thread:$0]  %s327, 256, %s329, %s317, 128, 128, 8
        $region36: #{tpu_custom_call.1} parent=15 // pred_fallthru
          _
      $region16: #{tpu_custom_call.1} parent=5 // pred_fallthru
        _
      %p335 = scmp.le.s32.totalorder 1, %s23
      %p336 = scmp.lt.s32.totalorder %s23, 7
      %p337 = pnand %p335, %p336
      %p338 = pneg %p337
      // Predicated region
      $region37: #{tpu_custom_call.1} parent=5 // pred_check
        _
      $region38: #{tpu_custom_call.1} parent=5 // pred_check_branch
        %340 = sbr.rel (%p337) target = $region40
      $region39: #{tpu_custom_call.1} parent=5 // pred_region
        %s341 = ssub.s32 %s23, 1
        %s342 = sand.u32 %s55, 1
        %s343 = scalar_lea.sflag [#allocation4], %s342
        %s344 = sand.u32 %s55, 1
        %s345 = smul.addr %s344, 16
        %s346 = scalar_lea.vmem [#allocation3], %s345
        // Predicated region
        $region41: #{tpu_custom_call.1} parent=39 // pred_check
          %p347 = pneg %p68
        $region42: #{tpu_custom_call.1} parent=39 // pred_check_branch
          %349 = sbr.rel (%p347) target = $region44
        $region43: #{tpu_custom_call.1} parent=39 // pred_region
          %351 = dma.done %s343, 256
        $region44: #{tpu_custom_call.1} parent=39 // pred_fallthru
          _
        %s352 = sand.u32 %s28, 1
        %s353 = scalar_lea.sflag [#allocation7], %s352
        %s354 = sand.u32 %s81, 1
        %s355 = smul.addr %s354, 16
        %s356 = scalar_lea.vmem [#allocation6], %s355
        // Predicated region
        $region45: #{tpu_custom_call.1} parent=39 // pred_check
          %p357 = pneg %p94
        $region46: #{tpu_custom_call.1} parent=39 // pred_check_branch
          %359 = sbr.rel (%p357) target = $region48
        $region47: #{tpu_custom_call.1} parent=39 // pred_region
          %361 = dma.done %s353, 256
        $region48: #{tpu_custom_call.1} parent=39 // pred_fallthru
          _
        %s362 = sand.u32 %s28, 1
        %s363 = scalar_lea.sflag [#allocation7], %s362
        %s364 = sand.u32 %s111, 1
        %s365 = smul.addr %s364, 2
        %s366 = scalar_lea.vmem [#allocation8], %s365
        // Predicated region
        $region49: #{tpu_custom_call.1} parent=39 // pred_check
          %p367 = pneg %p124
        $region50: #{tpu_custom_call.1} parent=39 // pred_check_branch
          %369 = sbr.rel (%p367) target = $region52
        $region51: #{tpu_custom_call.1} parent=39 // pred_region
          %371 = dma.done %s363, 32
        $region52: #{tpu_custom_call.1} parent=39 // pred_fallthru
          _
        %s372 = sand.u32 %s28, 1
        %s373 = scalar_lea.sflag [#allocation10], %s372
        %s374 = sand.u32 %s141, 1
        %s375 = smul.addr %s374, 2
        %s376 = scalar_lea.vmem [#allocation9], %s375
        // Predicated region
        $region53: #{tpu_custom_call.1} parent=39 // pred_check
          %p377 = pneg %p154
        $region54: #{tpu_custom_call.1} parent=39 // pred_check_branch
          %379 = sbr.rel (%p377) target = $region56
        $region55: #{tpu_custom_call.1} parent=39 // pred_region
          %381 = dma.done %s373, 32
        $region56: #{tpu_custom_call.1} parent=39 // pred_fallthru
          _
        %s382 = sand.u32 %s28, 1
        %s383 = scalar_lea.sflag [#allocation10], %s382
        %s384 = sand.u32 %s167, 1
        %s385 = smul.addr %s384, 16
        %s386 = scalar_lea.vmem [#allocation11], %s385
        // Predicated region
        $region57: #{tpu_custom_call.1} parent=39 // pred_check
          %p387 = pneg %p180
        $region58: #{tpu_custom_call.1} parent=39 // pred_check_branch
          %389 = sbr.rel (%p387) target = $region60
        $region59: #{tpu_custom_call.1} parent=39 // pred_region
          %391 = dma.done %s383, 256
        $region60: #{tpu_custom_call.1} parent=39 // pred_fallthru
          _
        %s392 = sand.u32 %s55, 1
        %s393 = scalar_lea.sflag [#allocation4], %s392
        %s394 = sand.u32 %s55, 1
        %s395 = smul.addr %s394, 16
        %s396 = scalar_lea.vmem [#allocation3], %s395
        %p397 = pneg %p68
        %p398 = pneg %p65
        %s399 = sand.u32 %s28, 1
        %s400 = scalar_lea.sflag [#allocation7], %s399
        %s401 = sand.u32 %s81, 1
        %s402 = smul.addr %s401, 16
        %s403 = scalar_lea.vmem [#allocation6], %s402
        %p404 = pneg %p94
        %p405 = pneg %p91
        %s406 = sand.u32 %s28, 1
        %s407 = scalar_lea.sflag [#allocation7], %s406
        %s408 = sand.u32 %s111, 1
        %s409 = smul.addr %s408, 2
        %s410 = scalar_lea.vmem [#allocation8], %s409
        %p411 = pneg %p124
        %p412 = pneg %p121
        %s413 = sand.u32 %s28, 1
        %s414 = scalar_lea.sflag [#allocation10], %s413
        %s415 = sand.u32 %s141, 1
        %s416 = smul.addr %s415, 2
        %s417 = scalar_lea.vmem [#allocation9], %s416
        %p418 = pneg %p154
        %p419 = pneg %p151
        %s420 = sand.u32 %s28, 1
        %s421 = scalar_lea.sflag [#allocation10], %s420
        %s422 = sand.u32 %s167, 1
        %s423 = smul.addr %s422, 16
        %s424 = scalar_lea.vmem [#allocation11], %s423
        %p425 = pneg %p180
        %p426 = pneg %p177
        %p427 = pneg %p206
        %p428 = pneg %p203
        %s429 = sand.u32 %s193, 1
        %s430 = scalar_lea.sflag [#allocation5], %s429
        %s431 = sand.u32 %s193, 1
        %s432 = scalar_lea.vmem [#allocation12], %s431
        %p433 = scmp.eq.s32.totalorder %s34, 0
        %p434 = scmp.eq.s32.totalorder %s35, 0
        %p435 = pnand %p433, %p434
        %p436 = pneg %p435
        // Predicated region
        $region61: #{tpu_custom_call.1} parent=39 // pred_check
          _
        $region62: #{tpu_custom_call.1} parent=39 // pred_check_branch
          %438 = sbr.rel (%p435) target = $region64
        $region63: #{tpu_custom_call.1} parent=39 // pred_region
          %439 = vst [vmem:[#allocation2] sm:$0x3] 0.0
        $region64: #{tpu_custom_call.1} parent=39 // pred_fallthru
          _
        %v440 = vld [vmem:[%s366] sm:$0x3]
        %v441 = vld [vmem:[%s376] sm:$0x3]
        %v442 = vld [vmem:[#allocation2] sm:$0x3]
        %v443 = vsub.f32 %v440, %v441
        %v444 = vand.u32 2147483647, %v443
        %v445 = vadd.f32 %v442, %v444
        %446 = vst [vmem:[#allocation2] sm:$0x3] %v445
        %p447 = scmp.eq.s32.totalorder %s34, 2
        %p448 = pnand %p447, %p434
        %p449 = pneg %p448
        // Predicated region
        $region65: #{tpu_custom_call.1} parent=39 // pred_check
          _
        $region66: #{tpu_custom_call.1} parent=39 // pred_check_branch
          %451 = sbr.rel (%p448) target = $region68
        $region67: #{tpu_custom_call.1} parent=39 // pred_region
          %v452 = vld [vmem:[#allocation2] sm:$0x3]
          %vm453 = vcmask 1041408
          %v454 = vsel %vm453, %v452, 0.0
          %455 = vadd.xlane.f32.xlu0 %v454
          %v456 = vpop.xlane.xlu0 %455
          %v457 = vrot.slane %v456, 4
          %v458 = vadd.f32 %v456, %v457
          %v459 = vrot.slane %v458, 2
          %v460 = vadd.f32 %v458, %v459
          %v461 = vrot.slane %v460, 1
          %v462 = vadd.f32 %v460, %v461
          %s463 = vtos %v462
          %v464 = vld [vmem:[%s346] sm:$0xff]
          %v465 = vld [vmem:[%s346 + $0x8] sm:$0xff]
          %v466 = vld [vmem:[%s356] sm:$0xff]
          %v467 = vld [vmem:[%s356 + $0x8] sm:$0xff]
          %v468 = vsub.f32 %v464, %v466
          %v469 = vsub.f32 %v465, %v467
          %v470 = vand.u32 2147483647, %v468
          %v471 = vand.u32 2147483647, %v469
          %vm472 = vcmask 130048
          %v473 = vsel %vm472, %v470, 0.0
          %v474 = vsel %vm472, %v471, 0.0
          %v475 = vadd.f32 %v473, %v474
          %476 = vadd.xlane.f32.xlu0 %v475
          %v477 = vpop.xlane.xlu0 %476
          %v478 = vrot.slane %v477, 4
          %v479 = vadd.f32 %v477, %v478
          %v480 = vrot.slane %v479, 2
          %v481 = vadd.f32 %v479, %v480
          %v482 = vrot.slane %v481, 1
          %v483 = vadd.f32 %v481, %v482
          %s484 = vtos %v483
          %v485 = vld [vmem:[%s386] sm:$0xff]
          %v486 = vld [vmem:[%s386 + $0x8] sm:$0xff]
          %v487 = vmul.f32 %v485, 2.0
          %v488 = vmul.f32 %v486, 2.0
          %vm491 = vcmask 1040384
          %v492 = vrot.slane %v487, 7
          %v493 = vrot.slane %v488, 7
          %v494 = vsel %vm491, %v492, %v493
          %v497 = vsub.f32 %v485, %v492
          %v498 = vsub.f32 %v486, %v494
          %v501 = vrot.slane %v485, 6
          %v502 = vrot.slane %v486, 6
          %v503 = vsel %vm453, %v501, %v502
          %v506 = vadd.f32 %v497, %v501
          %v507 = vadd.f32 %v498, %v503
          %v508 = vmul.f32 %v506, 1000000.0
          %v509 = vmul.f32 %v507, 1000000.0
          %510 = vrot.lane.b32.xlu0 %v487, 1
          %v511 = vpop.permute.xlu0 %510
          %512 = vrot.lane.b32.xlu0 %v488, 1
          %v513 = vpop.permute.xlu0 %512
          %v516 = vsub.f32 %v485, %v511
          %v517 = vsub.f32 %v486, %v513
          %518 = vrot.lane.b32.xlu0 %v485, 2
          %v519 = vpop.permute.xlu0 %518
          %520 = vrot.lane.b32.xlu0 %v486, 2
          %v521 = vpop.permute.xlu0 %520
          %v524 = vadd.f32 %v516, %v519
          %v525 = vadd.f32 %v517, %v521
          %v526 = vmul.f32 %v524, 0.01
          %v527 = vmul.f32 %v525, 0.01
          %v528 = vmul.f32 %v464, %v464
          %v529 = vmul.f32 %v465, %v465
          %532 = vrot.lane.b32.xlu0 %v526, 127
          %v533 = vpop.permute.xlu0 %532
          %534 = vrot.lane.b32.xlu0 %v527, 127
          %v535 = vpop.permute.xlu0 %534
          %v538 = vmul.f32 %v528, %v533
          %v539 = vmul.f32 %v529, %v535
          %v542 = vrot.slane %v538, 7
          %v543 = vrot.slane %v539, 7
          %v544 = vsel %vm491, %v542, %v543
          %v547 = vsub.f32 %v508, %v542
          %v548 = vsub.f32 %v509, %v544
          %v549 = vand.u32 2147483647, %v547
          %v550 = vand.u32 2147483647, %v548
          %vm553 = vcmask 1045504
          %v554 = vrot.slane %v549, 2
          %v555 = vrot.slane %v550, 2
          %v556 = vsel %vm553, %v554, %v555
          %557 = vrot.lane.b32.xlu0 %v556, 127
          %v558 = vpop.permute.xlu0 %557
          %559 = vrot.lane.b32.xlu0 %v555, 127
          %v560 = vpop.permute.xlu0 %559
          %vm563 = vcmask 113664
          %v564 = vsel %vm563, %v558, 0.0
          %vm565 = vcmask 111616
          %v566 = vsel %vm565, %v560, 0.0
          %v567 = vadd.f32 %v564, %v566
          %568 = vadd.xlane.f32.xlu0 %v567
          %v569 = vpop.xlane.xlu0 %568
          %v570 = vrot.slane %v569, 4
          %v571 = vadd.f32 %v569, %v570
          %v572 = vrot.slane %v571, 2
          %v573 = vadd.f32 %v571, %v572
          %v574 = vrot.slane %v573, 1
          %v575 = vadd.f32 %v573, %v574
          %s576 = vtos %v575
          %v577 = vlaneseq
          %v578 = vand.u32 %v577, 127
          %vm579 = vcmp.eq.s32.totalorder %v578, 0
          %vm580 = vcmp.eq.s32.totalorder %v578, 1
          %vm581 = vcmp.eq.s32.totalorder %v578, 2
          %v582 = vstv %s576
          %v583 = vsel %vm581, %v582, 0.0
          %v584 = vstv %s463
          %v585 = vsel %vm580, %v584, %v583
          %v586 = vstv %s484
          %v587 = vsel %vm579, %v586, %v585
          %588 = vst [vmem:[%s432] sm:$0x1] %v587
        $region68: #{tpu_custom_call.1} parent=39 // pred_fallthru
          _
        %s589 = sand.u32 %s193, 1
        %s590 = scalar_lea.sflag [#allocation5], %s589
        %s591 = sand.u32 %s193, 1
        %s592 = scalar_lea.vmem [#allocation12], %s591
        // Predicated region
        $region69: #{tpu_custom_call.1} parent=39 // pred_check
          %p593 = pneg %p203
        $region70: #{tpu_custom_call.1} parent=39 // pred_check_branch
          %595 = sbr.rel (%p593) target = $region72
        $region71: #{tpu_custom_call.1} parent=39 // pred_region
          %597 = vsyncadd %s590, 0
          %s598 = scalar_lea.hbm %s5, %s33
          %s600 = sshll.u32 %s592, 4
          %s601 = int_to_ptr.vmem [resolvable:$true] %s600
          %s602 = sshll.u32 %s598, 4
          %s603 = int_to_ptr.hbm [resolvable:$true] %s602
          %605 = dma.vmem_to_hbm [thread:$0]  %s601, 16, %s603, %s590
        $region72: #{tpu_custom_call.1} parent=39 // pred_fallthru
          _
      $region40: #{tpu_custom_call.1} parent=5 // pred_fallthru
        _
      %p606 = scmp.le.s32.totalorder 2, %s23
      // Predicated region
      $region73: #{tpu_custom_call.1} parent=5 // pred_check
        %p607 = pneg %p606
      $region74: #{tpu_custom_call.1} parent=5 // pred_check_branch
        %609 = sbr.rel (%p607) target = $region76
      $region75: #{tpu_custom_call.1} parent=5 // pred_region
        %s610 = ssub.s32 %s23, 2
        // Predicated region
        $region77: #{tpu_custom_call.1} parent=75 // pred_check
          %p611 = pneg %p209
        $region78: #{tpu_custom_call.1} parent=75 // pred_check_branch
          %613 = sbr.rel (%p611) target = $region80
        $region79: #{tpu_custom_call.1} parent=75 // pred_region
          %s614 = sand.u32 %s194, 1
          %s615 = scalar_lea.sflag [#allocation5], %s614
          %s616 = sand.u32 %s194, 1
          %s617 = scalar_lea.vmem [#allocation12], %s616
          %619 = dma.done %s615, 16
        $region80: #{tpu_custom_call.1} parent=75 // pred_fallthru
          _
      $region76: #{tpu_custom_call.1} parent=5 // pred_fallthru
        _
    $region6: #{tpu_custom_call.1} parent=1 // loop_footer
      %s27 = sadd.s32 1, %s23
    $region7: #{tpu_custom_call.1} parent=1 // loop_footer_branch
      %22 = sbr.rel target = $region3
    $region8: #{tpu_custom_call.1} parent=1 // loop_exit
      _
    %620 = vsyncpa [#allocation4], 1
    %s621 = scalar_lea.sflag [#allocation4], 1
    %622 = vsyncpa %s621, 1
    %623 = vsyncpa [#allocation7], 1
    %s624 = scalar_lea.sflag [#allocation7], 1
    %625 = vsyncpa %s624, 1
    %626 = vsyncpa [#allocation10], 1
    %s627 = scalar_lea.sflag [#allocation10], 1
    %628 = vsyncpa %s627, 1
    %629 = vsyncpa [#allocation5], 1
    %s630 = scalar_lea.sflag [#allocation5], 1
    %631 = vsyncpa %s630, 1

</llo_original>
